<compile_context>
chip_gen: v7x
topology: tpu7x:2x2x1
jax: 0.10.0
libtpu: 0.0.40
codegen_flags: <defaults>
</compile_context>

<pallas_src>
import functools

import jax
import jax.numpy as jnp
from jax import lax
from jax.experimental import pallas as pl
from jax.experimental.pallas import tpu as pltpu


def gat_kernel(x_ref, adj_ref, w_ref, v12_ref, o_ref, *, bt, n):
    """One grid step processes a fold of `bt` graphs as a flat M = bt*n block."""
    m = bt * n

    xa = x_ref[...]                                        # (M, in_c+1), ones col appended

    # fc (+ bias via the augmented ones column):  h = [x, 1] @ [[W^T], [b]]
    # Lane dim of w is zero-padded to a 128 multiple -> lane-dense h and output.
    h = jnp.dot(xa, w_ref[...], preferred_element_type=jnp.float32)   # (M, out_pad)

    # Fused a1/a2 projections straight from the augmented input (VPU multiply +
    # lane reduce; the affine biases ride the augmented column).  No dependency
    # on h, no skinny MXU matmuls, no separate scalar operands.
    v1 = v12_ref[0:1, :]                                   # (1, in_c+1)
    v2 = v12_ref[1:2, :]                                   # (1, in_c+1)
    h1 = jnp.sum(xa * v1, axis=-1, keepdims=True)          # (M, 1)
    h2 = jnp.sum(xa * v2, axis=-1, keepdims=True)          # (M, 1)

    # e[p, q] = leaky_relu(h1[p] + h2[q])  -- outer sum over the folded dim.
    e = h1 + h2.T                                          # (M, M)
    e = jnp.where(e > 0, e, 0.01 * e)                      # leaky_relu, slope 0.01

    # Adjacency mask.  When bt > 1 the per-batch attention is recovered with a
    # block-diagonal mask built IN-KERNEL from the (N, N) adjacency (no O(M^2)
    # HBM adjacency operand): adj_tiled = S @ adj @ S2 with iota-built 0/1
    # selection matrices, restricted to same-batch blocks.  Cross-batch entries
    # get -1e9 and underflow to exactly 0 after exp, so per-batch softmax/bmm
    # fall out of the single folded 2-D problem.
    adj = adj_ref[...]                                     # (N, N)
    if bt == 1:
        mask = adj > 0                                     # (M, M) since M == N
    else:
        pmod = lax.broadcasted_iota(jnp.int32, (m, n), 0) % n
        icol = lax.broadcasted_iota(jnp.int32, (m, n), 1)
        sel_l = jnp.where(pmod == icol, jnp.float32(1), jnp.float32(0))   # (M, N)
        qmod = lax.broadcasted_iota(jnp.int32, (n, m), 1) % n
        irow = lax.broadcasted_iota(jnp.int32, (n, m), 0)
        sel_r = jnp.where(irow == qmod, jnp.float32(1), jnp.float32(0))   # (N, M)
        adj_t = jnp.dot(sel_l,
                        jnp.dot(adj, sel_r, preferred_element_type=jnp.float32),
                        preferred_element_type=jnp.float32)               # (M, M)
        same_blk = (lax.broadcasted_iota(jnp.int32, (m, m), 0) // n ==
                    lax.broadcasted_iota(jnp.int32, (m, m), 1) // n)
        mask = jnp.logical_and(adj_t > 0, same_blk)

    att = jnp.where(mask, e, jnp.float32(-1e9))

    # softmax over dim=1 of [B, N, N]  ==  axis 0 (rows) of the folded block.
    # NOTE: relies on every column having at least one adj entry > 0
    # (guaranteed here by self-loops), matching the reference's usable regime.
    att = att - jnp.max(att, axis=0, keepdims=True)
    att = jnp.exp(att)
    denom = jnp.sum(att, axis=0, keepdims=True)            # >= 1 (self-loop)
    att = att * pl.reciprocal(denom, approx=True)          # EUP, off the VALU path

    # dropout: eval-mode identity
    # TODO(synk): training-mode stochastic dropout is not reproduced.

    out = jnp.dot(att, h, preferred_element_type=jnp.float32)   # (M, out_pad)
    o_ref[...] = out.astype(o_ref.dtype)


def pack_params(w_fc, b_fc, a1_w, a1_b, a2_w, a2_b):
    """One-time parameter fusion.  Hoist this out of the per-call path when the
    weights are static across calls (the packed arrays are tiny)."""
    out_c, in_c = w_fc.shape
    out_pad = ((out_c + 127) // 128) * 128

    # fc weight pre-transposed to (in_c, out_c) for the MXU, bias appended as an
    # extra row (consumed through the augmented ones column of x), zero-padded
    # on the lane dim so kernel-side stores are lane-dense.  The zero columns
    # multiply to zero and are sliced off after the call -> bit-exact.
    wpack = jnp.concatenate([w_fc.T, b_fc.reshape(1, out_c)], axis=0)   # (in_c+1, out_c)
    wpack = jnp.pad(wpack, ((0, 0), (0, out_pad - out_c)))              # (in_c+1, out_pad)

    # a1/a2 fused onto the (augmented) input side:
    #   h1 = h @ a1_w^T + a1_b = x @ (a1_w @ W)^T + (a1_w @ b + a1_b)
    v1 = (a1_w @ w_fc).reshape(1, in_c)
    c1 = (a1_w @ b_fc + a1_b).reshape(1, 1)
    v2 = (a2_w @ w_fc).reshape(1, in_c)
    c2 = (a2_w @ b_fc + a2_b).reshape(1, 1)
    v12 = jnp.concatenate(
        [jnp.concatenate([v1, c1], axis=1),
         jnp.concatenate([v2, c2], axis=1)], axis=0)                    # (2, in_c+1)

    return wpack, v12, out_c, out_pad


def _default_batch_block(B, N):
    """Keep grid >= 2 (both v7x TensorCores get work) while capping the fold at
    M = bt*N <= 256 (MXU-native M on v6e/v7x; keeps (M,M) temporaries tiny,
    well inside v7x's 64 MiB VMEM)."""
    if B == 1:
        return 1
    best = 1
    for bt in range(1, max(1, B // 2) + 1):
        if B % bt == 0 and bt * N <= 256:
            best = bt
    return best


def attention_layer_forward(x, adj, w_fc, b_fc, a1_w, a1_b, a2_w, a2_b,
                            *, batch_block=None, packed_params=None):
    B, N, in_c = x.shape

    if packed_params is None:
        packed_params = pack_params(w_fc, b_fc, a1_w, a1_b, a2_w, a2_b)
    wpack, v12, out_c, out_pad = packed_params

    bt = _default_batch_block(B, N) if batch_block is None else batch_block
    assert B % bt == 0, "batch_block must divide B"
    M = bt * N
    grid = (B // bt,)

    # --- free wrapper-side layout plumbing ----------------------------------
    # Fold batch into rows and append a ones column (carries the biases).
    x2 = x.reshape(B * N, in_c)
    xa = jnp.concatenate([x2, jnp.ones((B * N, 1), x.dtype)], axis=1)   # (B*N, in_c+1)
    adj_f = adj.astype(jnp.float32)                                     # (N, N)

    kernel = functools.partial(gat_kernel, bt=bt, n=N)

    out2 = pl.pallas_call(
        kernel,
        out_shape=jax.ShapeDtypeStruct((B * N, out_pad), x.dtype),
        grid_spec=pltpu.PrefetchScalarGridSpec(
            num_scalar_prefetch=0,
            grid=grid,
            in_specs=[
                pl.BlockSpec((M, in_c + 1), lambda g: (g, 0)),        # augmented x
                pl.BlockSpec((N, N), lambda g: (0, 0)),               # adjacency
                pl.BlockSpec((in_c + 1, out_pad), lambda g: (0, 0)),  # packed [W^T; b]
                pl.BlockSpec((2, in_c + 1), lambda g: (0, 0)),        # fused a1/a2 (+biases)
            ],
            out_specs=pl.BlockSpec((M, out_pad), lambda g: (g, 0)),   # lane-dense slab
        ),
        compiler_params=pltpu.CompilerParams(
            dimension_semantics=("parallel",)),
    )(xa, adj_f, wpack, v12)

    return out2[:, :out_c].reshape(B, N, out_c)


def reference_forward(x, adj, w_fc, b_fc, a1_w, a1_b, a2_w, a2_b):
    """Pure-JAX reference mirroring the PyTorch module (eval mode)."""
    h = jnp.einsum('bni,oi->bno', x, w_fc) + b_fc
    h1 = jnp.einsum('bno,po->bnp', h, a1_w) + a1_b          # (B, N, 1)
    h2 = jnp.einsum('bno,po->bnp', h, a2_w) + a2_b          # (B, N, 1)
    e = h1 + jnp.swapaxes(h2, 1, 2)                         # (B, N, N)
    e = jnp.where(e > 0, e, 0.01 * e)
    adj_b = jnp.broadcast_to(adj[None], e.shape)
    att = jnp.where(adj_b > 0, e, -1e9)
    att = jax.nn.softmax(att, axis=1)
    return jnp.einsum('bij,bjo->bio', att, h)


if __name__ == "__main__":
    B, N, in_c, out_c = 2, 16, 8, 32

    key = jax.random.PRNGKey(0)
    kx, kadj, kw, kb, k1w, k1b, k2w, k2b = jax.random.split(key, 8)

    x = jax.random.normal(kx, (B, N, in_c), dtype=jnp.float32)
    # adjacency: random 0/1 with self-loops (self-loops keep every softmax
    # column non-degenerate, as assumed by the kernel / reference).
    adj = (jax.random.uniform(kadj, (N, N)) > 0.5).astype(jnp.float32)
    adj = jnp.maximum(adj, jnp.eye(N, dtype=jnp.float32))

    # deterministic parameter init (Linear shapes from __init__)
    w_fc = jax.random.normal(kw, (out_c, in_c), dtype=jnp.float32) * 0.1
    b_fc = jax.random.normal(kb, (out_c,), dtype=jnp.float32) * 0.1
    a1_w = jax.random.normal(k1w, (1, out_c), dtype=jnp.float32) * 0.1
    a1_b = jax.random.normal(k1b, (1,), dtype=jnp.float32) * 0.1
    a2_w = jax.random.normal(k2w, (1, out_c), dtype=jnp.float32) * 0.1
    a2_b = jax.random.normal(k2b, (1,), dtype=jnp.float32) * 0.1

    ref = reference_forward(x, adj, w_fc, b_fc, a1_w, a1_b, a2_w, a2_b)

    # Default: grid of 2 steps (one batch per step); both TCs busy on v7x.
    out = attention_layer_forward(x, adj, w_fc, b_fc, a1_w, a1_b, a2_w, a2_b)
    out = jax.block_until_ready(out)
    assert out.shape == (B, N, out_c)
    # Tolerance accounts for the approximate (EUP) reciprocal in the softmax
    # normalization (~1e-4-level relative error).
    assert jnp.allclose(out, ref, atol=1e-3, rtol=1e-3), "mismatch vs reference"

    # Folded variant: both batches in one grid step -> exercises the in-kernel
    # block-diagonal mask path; packed params hoisted out of the call path.
    packed = pack_params(w_fc, b_fc, a1_w, a1_b, a2_w, a2_b)
    out_fold = attention_layer_forward(x, adj, w_fc, b_fc, a1_w, a1_b,
                                       a2_w, a2_b, batch_block=2,
                                       packed_params=packed)
    out_fold = jax.block_until_ready(out_fold)
    assert jnp.allclose(out_fold, ref, atol=1e-3, rtol=1e-3), \
        "mismatch vs reference (batch_block=2 fold)"

    print("KERNEL_OK")
</pallas_src>

<mosaic_0001>
module attributes {stable_mosaic.version = 11 : i64} {
  func.func @gat_kernel(%arg0: i32, %arg1: memref<16x9xf32, #tpu.memory_space<vmem>>, %arg2: memref<16x16xf32, #tpu.memory_space<vmem>>, %arg3: memref<9x128xf32, #tpu.memory_space<vmem>>, %arg4: memref<2x9xf32, #tpu.memory_space<vmem>>, %arg5: memref<16x128xf32, #tpu.memory_space<vmem>>) attributes {dimension_semantics = [#tpu.dimension_semantics<parallel>], iteration_bounds = array<i64: 2>, scalar_prefetch = 0 : i64, scratch_operands = 0 : i64, tpu.core_type = #tpu.core_type<tc>, window_params = [{transform_indices = @transform_0, window_bounds = array<i64: 16, 9>}, {pipeline_mode = #tpu.pipeline_mode<synchronous>, transform_indices = @transform_1, window_bounds = array<i64: 16, 16>}, {pipeline_mode = #tpu.pipeline_mode<synchronous>, transform_indices = @transform_2, window_bounds = array<i64: 9, 128>}, {pipeline_mode = #tpu.pipeline_mode<synchronous>, transform_indices = @transform_3, window_bounds = array<i64: 2, 9>}, {transform_indices = @transform_4, window_bounds = array<i64: 16, 128>}]} {
    %c0 = arith.constant 0 : index
    %c0_0 = arith.constant 0 : index
    %0 = vector.load %arg1[%c0, %c0_0] : memref<16x9xf32, #tpu.memory_space<vmem>>, vector<16x9xf32>
    %c0_1 = arith.constant 0 : index
    %c0_2 = arith.constant 0 : index
    %1 = vector.load %arg3[%c0_1, %c0_2] : memref<9x128xf32, #tpu.memory_space<vmem>>, vector<9x128xf32>
    %cst = arith.constant dense<0.000000e+00> : vector<16x128xf32>
    %2 = tpu.matmul %0, %1, %cst {dimension_numbers = #tpu.dot_dimension_numbers<[1], [0], [0], [1], [0, 0, 1, 1], [], []>} : vector<16x9xf32>, vector<9x128xf32>, vector<16x128xf32> -> vector<16x128xf32>
    %c0_3 = arith.constant 0 : index
    %c0_4 = arith.constant 0 : index
    %3 = vector.load %arg4[%c0_3, %c0_4] : memref<2x9xf32, #tpu.memory_space<vmem>>, vector<1x9xf32>
    %c1 = arith.constant 1 : index
    %c0_5 = arith.constant 0 : index
    %4 = vector.load %arg4[%c1, %c0_5] : memref<2x9xf32, #tpu.memory_space<vmem>>, vector<1x9xf32>
    %5 = vector.broadcast %3 : vector<1x9xf32> to vector<16x9xf32>
    %6 = arith.mulf %0, %5 : vector<16x9xf32>
    %cst_6 = arith.constant dense<0.000000e+00> : vector<16xf32>
    %7 = vector.multi_reduction <add>, %6, %cst_6 [1] : vector<16x9xf32> to vector<16xf32>
    %8 = vector.shape_cast %7 : vector<16xf32> to vector<16x1xf32>
    %9 = vector.broadcast %4 : vector<1x9xf32> to vector<16x9xf32>
    %10 = arith.mulf %0, %9 : vector<16x9xf32>
    %cst_7 = arith.constant dense<0.000000e+00> : vector<16xf32>
    %11 = vector.multi_reduction <add>, %10, %cst_7 [1] : vector<16x9xf32> to vector<16xf32>
    %12 = vector.shape_cast %11 : vector<16xf32> to vector<16x1xf32>
    %13 = tpu.transpose %12, [1, 0] : vector<16x1xf32> -> vector<1x16xf32>
    %14 = vector.broadcast %8 : vector<16x1xf32> to vector<16x16xf32>
    %15 = vector.broadcast %13 : vector<1x16xf32> to vector<16x16xf32>
    %16 = arith.addf %14, %15 : vector<16x16xf32>
    %cst_8 = arith.constant 0.000000e+00 : f32
    %17 = vector.broadcast %cst_8 : f32 to vector<16x16xf32>
    %18 = arith.cmpf ogt, %16, %17 : vector<16x16xf32>
    %cst_9 = arith.constant 0.00999999977 : f32
    %19 = vector.broadcast %cst_9 : f32 to vector<16x16xf32>
    %20 = arith.mulf %19, %16 : vector<16x16xf32>
    %21 = arith.select %18, %16, %20 : vector<16x16xi1>, vector<16x16xf32>
    %c0_10 = arith.constant 0 : index
    %c0_11 = arith.constant 0 : index
    %22 = vector.load %arg2[%c0_10, %c0_11] : memref<16x16xf32, #tpu.memory_space<vmem>>, vector<16x16xf32>
    %cst_12 = arith.constant 0.000000e+00 : f32
    %23 = vector.broadcast %cst_12 : f32 to vector<16x16xf32>
    %24 = arith.cmpf ogt, %22, %23 : vector<16x16xf32>
    %cst_13 = arith.constant -1.000000e+09 : f32
    %25 = vector.broadcast %cst_13 : f32 to vector<16x16xf32>
    %26 = arith.select %24, %21, %25 : vector<16x16xi1>, vector<16x16xf32>
    %cst_14 = arith.constant dense<0xFF800000> : vector<16xf32>
    %27 = vector.multi_reduction <maximumf>, %26, %cst_14 [0] : vector<16x16xf32> to vector<16xf32>
    %28 = vector.shape_cast %27 : vector<16xf32> to vector<1x16xf32>
    %29 = vector.broadcast %28 : vector<1x16xf32> to vector<16x16xf32>
    %30 = arith.subf %26, %29 : vector<16x16xf32>
    %31 = math.exp %30 : vector<16x16xf32>
    %cst_15 = arith.constant dense<0.000000e+00> : vector<16xf32>
    %32 = vector.multi_reduction <add>, %31, %cst_15 [0] : vector<16x16xf32> to vector<16xf32>
    %33 = vector.shape_cast %32 : vector<16xf32> to vector<1x16xf32>
    %34 = tpu.reciprocal %33 {approx = true} : vector<1x16xf32> -> vector<1x16xf32>
    %35 = vector.broadcast %34 : vector<1x16xf32> to vector<16x16xf32>
    %36 = arith.mulf %31, %35 : vector<16x16xf32>
    %cst_16 = arith.constant dense<0.000000e+00> : vector<16x128xf32>
    %37 = tpu.matmul %36, %2, %cst_16 {dimension_numbers = #tpu.dot_dimension_numbers<[1], [0], [0], [1], [0, 0, 1, 1], [], []>} : vector<16x16xf32>, vector<16x128xf32>, vector<16x128xf32> -> vector<16x128xf32>
    %c0_17 = arith.constant 0 : index
    %c0_18 = arith.constant 0 : index
    %38 = vector.load %arg5[%c0_17, %c0_18] : memref<16x128xf32, #tpu.memory_space<vmem>>, vector<16x128xf32>
    tpu.vector_store %arg5[%c0_17, %c0_18], %37 {strides = array<i32>} : memref<16x128xf32, #tpu.memory_space<vmem>>, vector<16x128xf32>,
    return
  }
  func.func @transform_0(%arg0: i32) -> (i32, i32) {
    %c0_i32 = arith.constant 0 : i32
    %c0_i32_0 = arith.constant 0 : i32
    return %arg0, %c0_i32 : i32, i32
  }
  func.func @transform_1(%arg0: i32) -> (i32, i32) {
    %c0_i32 = arith.constant 0 : i32
    %c0_i32_0 = arith.constant 0 : i32
    %c0_i32_1 = arith.constant 0 : i32
    return %c0_i32, %c0_i32_0 : i32, i32
  }
  func.func @transform_2(%arg0: i32) -> (i32, i32) {
    %c0_i32 = arith.constant 0 : i32
    %c0_i32_0 = arith.constant 0 : i32
    %c0_i32_1 = arith.constant 0 : i32
    return %c0_i32, %c0_i32_0 : i32, i32
  }
  func.func @transform_3(%arg0: i32) -> (i32, i32) {
    %c0_i32 = arith.constant 0 : i32
    %c0_i32_0 = arith.constant 0 : i32
    %c0_i32_1 = arith.constant 0 : i32
    return %c0_i32, %c0_i32_0 : i32, i32
  }
  func.func @transform_4(%arg0: i32) -> (i32, i32) {
    %c0_i32 = arith.constant 0 : i32
    %c0_i32_0 = arith.constant 0 : i32
    return %arg0, %c0_i32 : i32, i32
  }
}

</mosaic_0001>

<llo_original>
// kernel: tpu_custom_call.1
$region0: #{tpu_custom_call.1}
  #allocation0 [shape = 'u32[]', space=smem, size = 0x4, offset = 0x4, fixed_abs, tag = 'smem constant byte address 0x4 - core index']
  #allocation1 [shape = 'u32[144,128]{1,0:T(1,128)}', space=vmem, size = 0x12000, scoped, tag = 'internal scratch']
  %s0 = inlined_call_operand.vmem [shape: f32[32,9], index: 0, kind: input, shape index: {}]
  %s1 = inlined_call_operand.vmem [shape: f32[16,16], index: 1, kind: input, shape index: {}]
  %s2 = inlined_call_operand.vmem [shape: f32[9,128], index: 2, kind: input, shape index: {}]
  %s3 = inlined_call_operand.vmem [shape: f32[2,9], index: 3, kind: input, shape index: {}]
  %s4 = inlined_call_operand.hbm [shape: f32[32,128], index: 4, kind: output, shape index: {}]
  %s5 = sld [smem:[#allocation0]]
  $region49: #{tpu_custom_call.1} parent=0
    _
  %s7 = ssub.s32 1, %s5
  %s8 = scalar_select 0, %s7, %s5
  $region1: #{tpu_custom_call.1} parent=0
    #allocation2 [shape = 'u8[16384]{0}', space=vmem, size = 0x4000, scoped, tag = 'output window, operand 0']
    #allocation3 [shape = 's32[2]{0}', space=sflag, size = 0x8, scoped, tag = 'scoped memory for tpu_custom_call.1']
    %9 = vsyncpa [#allocation3], 0
    %s10 = scalar_lea.sflag [#allocation3], 1
    %11 = vsyncpa %s10, 0
    loop: start=0, step=1, limit=4
    $region2: #{tpu_custom_call.1} parent=1 // loop_pre_header
      _
    $region3: #{tpu_custom_call.1} parent=1 // loop_header
      %s13 = sphi 0, %s17
      %p14 = scmp.ge.s32.totalorder %s13, 4
      %s23 = sphi 0, %s25
      %s26 = sphi 0, %s23
      %s27 = sphi 0, %s26
      %s43 = sphi 0, %s27
      %s47 = sphi 0, %s47
      %s49 = sphi 0, %s47
      %s50 = sphi 0, %s49
      %s64 = sphi 0, %s50
      %s68 = sphi 0, %s68
      %s70 = sphi 0, %s68
      %s71 = sphi 0, %s70
      %s85 = sphi 0, %s71
      %s89 = sphi 0, %s89
      %s91 = sphi 0, %s89
      %s92 = sphi 0, %s91
      %s106 = sphi 0, %s92
      %s112 = sphi 0, %s114
      %s115 = sphi 0, %s112
      %s116 = sphi 0, %s115
      %s132 = sphi 0, %s116
    $region4: #{tpu_custom_call.1} parent=1 // loop_header_branch
      %16 = sbr.rel (%p14) target = $region8
    $region5: #{tpu_custom_call.1} parent=1 // loop_body
      %s18 = ssub.s32 %s13, 1
      %s19 = ssub.s32 %s13, 2
      %s20 = sadd.s32 %s13, 1
      %s21 = ssub.s32 %s13, %s20
      %p22 = scmp.eq.s32.totalorder %s21, 0
      %s24 = sadd.s32 %s23, 1
      %s25 = scalar_select %p22, %s23, %s24
      %p28 = pneg %p22
      %p29 = scmp.eq.s32.totalorder %s13, 1
      %p30 = por %p28, %p29
      %p31 = scmp.ne.s32.totalorder %s23, %s26
      %p32 = scmp.eq.s32.totalorder %s13, 0
      %p33 = por %p31, %p32
      %p34 = scmp.ne.s32.totalorder %s23, %s26
      %p35 = scmp.eq.s32.totalorder %s18, 1
      %p36 = por %p34, %p35
      %p37 = scmp.ne.s32.totalorder %s26, %s27
      %p38 = scmp.eq.s32.totalorder %s18, 0
      %p39 = por %p37, %p38
      %p40 = scmp.ne.s32.totalorder %s26, %s27
      %p41 = scmp.eq.s32.totalorder %s19, 1
      %p42 = por %p40, %p41
      %p44 = scmp.ne.s32.totalorder %s27, %s43
      %p45 = scmp.eq.s32.totalorder %s19, 0
      %p46 = por %p44, %p45
      %s48 = sadd.s32 %s47, 1
      %p51 = scmp.eq.s32.totalorder %s13, 1
      %p52 = scmp.ne.s32.totalorder %s47, %s49
      %p53 = scmp.eq.s32.totalorder %s13, 0
      %p54 = por %p52, %p53
      %p55 = scmp.ne.s32.totalorder %s47, %s49
      %p56 = scmp.eq.s32.totalorder %s18, 1
      %p57 = por %p55, %p56
      %p58 = scmp.ne.s32.totalorder %s49, %s50
      %p59 = scmp.eq.s32.totalorder %s18, 0
      %p60 = por %p58, %p59
      %p61 = scmp.ne.s32.totalorder %s49, %s50
      %p62 = scmp.eq.s32.totalorder %s19, 1
      %p63 = por %p61, %p62
      %p65 = scmp.ne.s32.totalorder %s50, %s64
      %p66 = scmp.eq.s32.totalorder %s19, 0
      %p67 = por %p65, %p66
      %s69 = sadd.s32 %s68, 1
      %p72 = scmp.eq.s32.totalorder %s13, 1
      %p73 = scmp.ne.s32.totalorder %s68, %s70
      %p74 = scmp.eq.s32.totalorder %s13, 0
      %p75 = por %p73, %p74
      %p76 = scmp.ne.s32.totalorder %s68, %s70
      %p77 = scmp.eq.s32.totalorder %s18, 1
      %p78 = por %p76, %p77
      %p79 = scmp.ne.s32.totalorder %s70, %s71
      %p80 = scmp.eq.s32.totalorder %s18, 0
      %p81 = por %p79, %p80
      %p82 = scmp.ne.s32.totalorder %s70, %s71
      %p83 = scmp.eq.s32.totalorder %s19, 1
      %p84 = por %p82, %p83
      %p86 = scmp.ne.s32.totalorder %s71, %s85
      %p87 = scmp.eq.s32.totalorder %s19, 0
      %p88 = por %p86, %p87
      %s90 = sadd.s32 %s89, 1
      %p93 = scmp.eq.s32.totalorder %s13, 1
      %p94 = scmp.ne.s32.totalorder %s89, %s91
      %p95 = scmp.eq.s32.totalorder %s13, 0
      %p96 = por %p94, %p95
      %p97 = scmp.ne.s32.totalorder %s89, %s91
      %p98 = scmp.eq.s32.totalorder %s18, 1
      %p99 = por %p97, %p98
      %p100 = scmp.ne.s32.totalorder %s91, %s92
      %p101 = scmp.eq.s32.totalorder %s18, 0
      %p102 = por %p100, %p101
      %p103 = scmp.ne.s32.totalorder %s91, %s92
      %p104 = scmp.eq.s32.totalorder %s19, 1
      %p105 = por %p103, %p104
      %p107 = scmp.ne.s32.totalorder %s92, %s106
      %p108 = scmp.eq.s32.totalorder %s19, 0
      %p109 = por %p107, %p108
      %s110 = ssub.s32 %s13, %s20
      %p111 = scmp.eq.s32.totalorder %s110, 0
      %s113 = sadd.s32 %s112, 1
      %s114 = scalar_select %p111, %s112, %s113
      %p117 = pneg %p111
      %p118 = scmp.eq.s32.totalorder %s13, 1
      %p119 = por %p117, %p118
      %p120 = scmp.ne.s32.totalorder %s112, %s115
      %p121 = scmp.eq.s32.totalorder %s13, 0
      %p122 = por %p120, %p121
      %p123 = scmp.ne.s32.totalorder %s112, %s115
      %p124 = scmp.eq.s32.totalorder %s18, 1
      %p125 = por %p123, %p124
      %p126 = scmp.ne.s32.totalorder %s115, %s116
      %p127 = scmp.eq.s32.totalorder %s18, 0
      %p128 = por %p126, %p127
      %p129 = scmp.ne.s32.totalorder %s115, %s116
      %p130 = scmp.eq.s32.totalorder %s19, 1
      %p131 = por %p129, %p130
      %p133 = scmp.ne.s32.totalorder %s116, %s132
      %p134 = scmp.eq.s32.totalorder %s19, 0
      %p135 = por %p133, %p134
      %p136 = scmp.le.s32.totalorder 1, %s13
      %p137 = scmp.lt.s32.totalorder %s13, 3
      %p138 = pnand %p136, %p137
      %p139 = pneg %p138
      // Predicated region
      $region9: #{tpu_custom_call.1} parent=5 // pred_check
        _
      $region10: #{tpu_custom_call.1} parent=5 // pred_check_branch
        %141 = sbr.rel (%p138) target = $region12
      $region11: #{tpu_custom_call.1} parent=5 // pred_region
        %s142 = ssub.s32 %s13, 1
        // Predicated region
        $region13: #{tpu_custom_call.1} parent=11 // pred_check
          %p143 = pneg %p60
        $region14: #{tpu_custom_call.1} parent=11 // pred_check_branch
          %145 = sbr.rel (%p143) target = $region16
        $region15: #{tpu_custom_call.1} parent=11 // pred_region
          _
        $region16: #{tpu_custom_call.1} parent=11 // pred_fallthru
          _
        // Predicated region
        $region17: #{tpu_custom_call.1} parent=11 // pred_check
          %p146 = pneg %p81
        $region18: #{tpu_custom_call.1} parent=11 // pred_check_branch
          %148 = sbr.rel (%p146) target = $region20
        $region19: #{tpu_custom_call.1} parent=11 // pred_region
          _
        $region20: #{tpu_custom_call.1} parent=11 // pred_fallthru
          _
        // Predicated region
        $region21: #{tpu_custom_call.1} parent=11 // pred_check
          %p149 = pneg %p102
        $region22: #{tpu_custom_call.1} parent=11 // pred_check_branch
          %151 = sbr.rel (%p149) target = $region24
        $region23: #{tpu_custom_call.1} parent=11 // pred_region
          _
        $region24: #{tpu_custom_call.1} parent=11 // pred_fallthru
          _
      $region12: #{tpu_custom_call.1} parent=5 // pred_fallthru
        _
      %p152 = scmp.lt.s32.totalorder %s13, 2
      // Predicated region
      $region25: #{tpu_custom_call.1} parent=5 // pred_check
        %p153 = pneg %p152
      $region26: #{tpu_custom_call.1} parent=5 // pred_check_branch
        %155 = sbr.rel (%p153) target = $region28
      $region27: #{tpu_custom_call.1} parent=5 // pred_region
        // Predicated region
        $region29: #{tpu_custom_call.1} parent=27 // pred_check
          %p156 = pneg %p33
        $region30: #{tpu_custom_call.1} parent=27 // pred_check_branch
          %158 = sbr.rel (%p156) target = $region32
        $region31: #{tpu_custom_call.1} parent=27 // pred_region
          %s159 = smul.u32 2, %s13
          %p160 = scmp.lt.s32.totalorder %s159, 3
          %s161 = scalar_select %p160, %s159, 3
          %s162 = smul.addr %s161, 8
          %s163 = scalar_lea.vmem %s0, %s162
          %s164 = smul.u32 2, %s13
        $region32: #{tpu_custom_call.1} parent=27 // pred_fallthru
          _
      $region28: #{tpu_custom_call.1} parent=5 // pred_fallthru
        _
      %p165 = scmp.le.s32.totalorder 1, %s13
      %p166 = scmp.lt.s32.totalorder %s13, 3
      %p167 = pnand %p165, %p166
      %p168 = pneg %p167
      // Predicated region
      $region33: #{tpu_custom_call.1} parent=5 // pred_check
        _
      $region34: #{tpu_custom_call.1} parent=5 // pred_check_branch
        %170 = sbr.rel (%p167) target = $region36
      $region35: #{tpu_custom_call.1} parent=5 // pred_region
        %s171 = ssub.s32 %s13, 1
        %s172 = smul.u32 2, %s18
        %p173 = scmp.lt.s32.totalorder %s172, 3
        %s174 = scalar_select %p173, %s172, 3
        %s175 = smul.addr %s174, 8
        %s176 = scalar_lea.vmem %s0, %s175
        %p177 = pneg %p39
        %p178 = pneg %p36
        %p179 = pneg %p60
        %p180 = pneg %p57
        %p181 = pneg %p81
        %p182 = pneg %p78
        %p183 = pneg %p102
        %p184 = pneg %p99
        %p185 = pneg %p128
        %p186 = pneg %p125
        %s187 = sand.u32 %s115, 1
        %s188 = scalar_lea.sflag [#allocation3], %s187
        %s189 = sand.u32 %s115, 1
        %s190 = smul.addr %s189, 16
        %s191 = scalar_lea.vmem [#allocation2], %s190
        %s192 = smul.u32 2, %s18
        %p193 = scmp.lt.s32.totalorder %s192, 3
        %s194 = scalar_select %p193, %s192, 3
        %s195 = smul.addr %s194, 8
        %s196 = scalar_lea.vmem %s0, %s195
        %s197 = smul.u32 2, %s18
        %s198 = smul.u32 2, %s18
        %v199 = vld [vmem:[%s196] sm:$0xff]
        %v200 = vld [vmem:[%s196 + $0x8] sm:$0xff]
        %v201 = vld [vmem:[%s2] sm:$0xff]
        %v202 = vld [vmem:[%s2 + $0x8] sm:$0x1]
        %vm203 = vcmask 72704
        %v205 = vsel %vm203, %v199, 0
        %v208 = vsel %vm203, %v200, 0
        %vm210 = vcmask 1040384
        %v212 = vsel %vm210, %v202, 0
        %214 = vmatprep.subr.mxu0 0.0
        %215 = vmatpush1.msra.mxu0 %v201
        %216 = vmatprep.subr.mxu0 0.0
        %217 = vmatpush1.msra.mxu0 %v212
        %218 = vmatprep.subr.mxu0 0.0
        %219 = vmatpush1.msra.mxu0 0.0
        %220 = vmatprep.subr.mxu0 0.0
        %221 = vmatpush1.msra.mxu0 0.0
        %222 = vmatprep.subr.mxu0 0.0
        %223 = vmatpush1.msra.mxu0 0.0
        %224 = vmatprep.subr.mxu0 0.0
        %225 = vmatpush1.msra.mxu0 0.0
        %226 = vmatprep.subr.mxu0 0.0
        %227 = vmatpush1.msra.mxu0 0.0
        %228 = vmatprep.subr.mxu0 0.0
        %229 = vmatpush1.msra.mxu0 0.0
        %230 = vmatprep.subr.mxu0 0.0
        %231 = vmatpush1.msra.mxu0 0.0
        %232 = vmatprep.subr.mxu0 0.0
        %233 = vmatpush1.msra.mxu0 0.0
        %234 = vmatprep.subr.mxu0 0.0
        %235 = vmatpush1.msra.mxu0 0.0
        %236 = vmatprep.subr.mxu0 0.0
        %237 = vmatpush1.msra.mxu0 0.0
        %238 = vmatprep.subr.mxu0 0.0
        %239 = vmatpush1.msra.mxu0 0.0
        %240 = vmatprep.subr.mxu0 0.0
        %241 = vmatpush1.msra.mxu0 0.0
        %242 = vmatprep.subr.mxu0 0.0
        %243 = vmatpush1.msra.mxu0 0.0
        %244 = vmatprep.subr.mxu0 0.0
        %245 = vmatpush1.msra.mxu0 0.0
        %246 = vmatprep.subr.mxu0 0.0
        %247 = vmatpush1.msra.mxu0 0.0
        %248 = vmatprep.subr.mxu0 0.0
        %249 = vmatpush1.msra.mxu0 0.0
        %250 = vmatprep.subr.mxu0 0.0
        %251 = vmatpush1.msra.mxu0 0.0
        %252 = vmatprep.subr.mxu0 0.0
        %253 = vmatpush1.msra.mxu0 0.0
        %254 = vmatprep.subr.mxu0 0.0
        %255 = vmatpush1.msra.mxu0 0.0
        %256 = vmatprep.subr.mxu0 0.0
        %257 = vmatpush1.msra.mxu0 0.0
        %258 = vmatprep.subr.mxu0 0.0
        %259 = vmatpush1.msra.mxu0 0.0
        %260 = vmatprep.subr.mxu0 0.0
        %261 = vmatpush1.msra.mxu0 0.0
        %262 = vmatprep.subr.mxu0 0.0
        %263 = vmatpush1.msra.mxu0 0.0
        %264 = vmatprep.subr.mxu0 0.0
        %265 = vmatpush1.msra.mxu0 0.0
        %266 = vmatprep.subr.mxu0 0.0
        %267 = vmatpush1.msra.mxu0 0.0
        %268 = vmatprep.subr.mxu0 0.0
        %269 = vmatpush1.msra.mxu0 0.0
        %270 = vmatprep.subr.mxu0 0.0
        %271 = vmatpush1.msra.mxu0 0.0
        %272 = vmatprep.subr.mxu0 0.0
        %273 = vmatpush1.msra.mxu0 0.0
        %274 = vmatprep.subr.mxu0 0.0
        %275 = vmatpush1.msra.mxu0 0.0
        %276 = vmatprep.subr.mxu0 0.0
        %277 = vmatpush1.msra.mxu0 0.0
        %278 = vmatprep.mubr.f32.mxu0 0.0
        %279 = vmatmul.mubr.f32.gmra.mrb[0].mxu0 %v205
        %v280 = vpop.f32.mrb[0].mxu0
        %v281 = vadd.f32 0.0, %v280
        %v282 = vpop.f32.mrb[0].mxu0
        %283 = vmatprep.mubr.f32.mxu0 0.0
        %284 = vmatmul.mubr.f32.gmra.mrb[0].mxu0 %v208
        %v285 = vpop.f32.mrb[0].mxu0
        %v286 = vadd.f32 0.0, %v285
        %v287 = vpop.f32.mrb[0].mxu0
        %288 = vdwg.mxu0
        %v289 = vld [vmem:[%s3] sm:$0x1]
        %v290 = vld [vmem:[%s3 + $0x1] sm:$0x1]
        %v291 = vlaneseq
        %v292 = vshrl.u32 %v291, 7
        %v293 = vsub.s32 0, %v292
        %v294 = vrot.slane %v289, %v293
        %v295 = vmul.f32 %v199, %v294
        %v296 = vmul.f32 %v200, %v294
        %v297 = vsel %vm203, %v295, 0.0
        %298 = vadd.xlane.f32.xlu0 %v297
        %v299 = vpop.xlane.xlu0 %298
        %v300 = vsel %vm203, %v296, 0.0
        %301 = vadd.xlane.f32.xlu0 %v300
        %v302 = vpop.xlane.xlu0 %301
        %v303 = vlaneseq
        %v304 = vshrl.u32 %v303, 7
        %v305 = vsub.s32 0, %v304
        %v306 = vrot.slane %v290, %v305
        %v307 = vmul.f32 %v199, %v306
        %v308 = vmul.f32 %v200, %v306
        %v309 = vsel %vm203, %v307, 0.0
        %310 = vadd.xlane.f32.xlu0 %v309
        %v311 = vpop.xlane.xlu0 %310
        %v312 = vsel %vm203, %v308, 0.0
        %313 = vadd.xlane.f32.xlu0 %v312
        %v314 = vpop.xlane.xlu0 %313
        %315 = vxpose.xlu0.b32.start [1/16] %v311, 128
        %316 = vxpose.xlu0.b32.cont [2/16] %v314, 128
        %317 = vxpose.xlu0.b32.cont [3/16] 0.0, 128
        %318 = vxpose.xlu0.b32.cont [4/16] 0.0, 128
        %319 = vxpose.xlu0.b32.cont [5/16] 0.0, 128
        %320 = vxpose.xlu0.b32.cont [6/16] 0.0, 128
        %321 = vxpose.xlu0.b32.cont [7/16] 0.0, 128
        %322 = vxpose.xlu0.b32.cont [8/16] 0.0, 128
        %323 = vxpose.xlu0.b32.cont [9/16] 0.0, 128
        %324 = vxpose.xlu0.b32.cont [10/16] 0.0, 128
        %325 = vxpose.xlu0.b32.cont [11/16] 0.0, 128
        %326 = vxpose.xlu0.b32.cont [12/16] 0.0, 128
        %327 = vxpose.xlu0.b32.cont [13/16] 0.0, 128
        %328 = vxpose.xlu0.b32.cont [14/16] 0.0, 128
        %329 = vxpose.xlu0.b32.cont [15/16] 0.0, 128
        %330 = vxpose.xlu0.b32.end [16/16] 0.0, 128
        %v331 = vpop.trf.xlu0
        %v332 = vpop.trf.xlu0
        %v333 = vpop.trf.xlu0
        %v334 = vpop.trf.xlu0
        %v335 = vpop.trf.xlu0
        %v336 = vpop.trf.xlu0
        %v337 = vpop.trf.xlu0
        %v338 = vpop.trf.xlu0
        %v339 = vpop.trf.xlu0
        %v340 = vpop.trf.xlu0
        %v341 = vpop.trf.xlu0
        %v342 = vpop.trf.xlu0
        %v343 = vpop.trf.xlu0
        %v344 = vpop.trf.xlu0
        %v345 = vpop.trf.xlu0
        %v346 = vpop.trf.xlu0
        %v347 = vlaneseq
        %v348 = vshrl.u32 %v347, 7
        %v349 = vsub.s32 0, %v348
        %v350 = vrot.slane %v331, %v349
        %v351 = vadd.f32 %v299, %v350
        %v352 = vadd.f32 %v302, %v350
        %vm353 = vcmp.gt.f32.partialorder %v351, 0.0
        %vm354 = vcmp.gt.f32.partialorder %v352, 0.0
        %v355 = vmul.f32 %v351, 0.01
        %v356 = vmul.f32 %v352, 0.01
        %v357 = vsel %vm353, %v351, %v355
        %v358 = vsel %vm354, %v352, %v356
        %v359 = vld [vmem:[%s1] sm:$0xff]
        %v360 = vld [vmem:[%s1 + $0x8] sm:$0xff]
        %vm361 = vcmp.gt.f32.partialorder %v359, 0.0
        %vm362 = vcmp.gt.f32.partialorder %v360, 0.0
        %v363 = vsel %vm361, %v357, -1e+09
        %v364 = vsel %vm362, %v358, -1e+09
        %vm365 = vcmask 130048
        %v366 = vsel %vm365, %v363, -inf
        %v367 = vsel %vm365, %v364, -inf
        %v368 = vmax.f32 %v366, %v367
        %v369 = vrot.slane %v368, 4
        %v370 = vmax.f32 %v368, %v369
        %v371 = vrot.slane %v370, 2
        %v372 = vmax.f32 %v370, %v371
        %v373 = vrot.slane %v372, 1
        %v374 = vmax.f32 %v372, %v373
        %v375 = vsub.f32 %v363, %v374
        %v376 = vsub.f32 %v364, %v374
        %v377 = vmul.f32 %v375, 1.442695
        %v378 = vpow.pop %v377
        %v379 = vmul.f32 %v376, 1.442695
        %v380 = vpow.pop %v379
        %v381 = vsel %vm365, %v378, 0.0
        %v382 = vsel %vm365, %v380, 0.0
        %v383 = vadd.f32 %v381, %v382
        %v384 = vrot.slane %v383, 4
        %v385 = vadd.f32 %v383, %v384
        %v386 = vrot.slane %v385, 2
        %v387 = vadd.f32 %v385, %v386
        %v388 = vrot.slane %v387, 1
        %v389 = vadd.f32 %v387, %v388
        %v390 = vrcp.pop %v389
        %v391 = vmul.f32 %v378, %v390
        %v392 = vmul.f32 %v380, %v390
        %v394 = vsel %vm365, %v391, 0
        %v397 = vsel %vm365, %v392, 0
        %399 = vmatprep.subr.mxu0 0.0
        %400 = vmatpush1.msra.mxu0 %v281
        %401 = vmatprep.subr.mxu0 0.0
        %402 = vmatpush1.msra.mxu0 %v286
        %403 = vmatprep.subr.mxu0 0.0
        %404 = vmatpush1.msra.mxu0 0.0
        %405 = vmatprep.subr.mxu0 0.0
        %406 = vmatpush1.msra.mxu0 0.0
        %407 = vmatprep.subr.mxu0 0.0
        %408 = vmatpush1.msra.mxu0 0.0
        %409 = vmatprep.subr.mxu0 0.0
        %410 = vmatpush1.msra.mxu0 0.0
        %411 = vmatprep.subr.mxu0 0.0
        %412 = vmatpush1.msra.mxu0 0.0
        %413 = vmatprep.subr.mxu0 0.0
        %414 = vmatpush1.msra.mxu0 0.0
        %415 = vmatprep.subr.mxu0 0.0
        %416 = vmatpush1.msra.mxu0 0.0
        %417 = vmatprep.subr.mxu0 0.0
        %418 = vmatpush1.msra.mxu0 0.0
        %419 = vmatprep.subr.mxu0 0.0
        %420 = vmatpush1.msra.mxu0 0.0
        %421 = vmatprep.subr.mxu0 0.0
        %422 = vmatpush1.msra.mxu0 0.0
        %423 = vmatprep.subr.mxu0 0.0
        %424 = vmatpush1.msra.mxu0 0.0
        %425 = vmatprep.subr.mxu0 0.0
        %426 = vmatpush1.msra.mxu0 0.0
        %427 = vmatprep.subr.mxu0 0.0
        %428 = vmatpush1.msra.mxu0 0.0
        %429 = vmatprep.subr.mxu0 0.0
        %430 = vmatpush1.msra.mxu0 0.0
        %431 = vmatprep.subr.mxu0 0.0
        %432 = vmatpush1.msra.mxu0 0.0
        %433 = vmatprep.subr.mxu0 0.0
        %434 = vmatpush1.msra.mxu0 0.0
        %435 = vmatprep.subr.mxu0 0.0
        %436 = vmatpush1.msra.mxu0 0.0
        %437 = vmatprep.subr.mxu0 0.0
        %438 = vmatpush1.msra.mxu0 0.0
        %439 = vmatprep.subr.mxu0 0.0
        %440 = vmatpush1.msra.mxu0 0.0
        %441 = vmatprep.subr.mxu0 0.0
        %442 = vmatpush1.msra.mxu0 0.0
        %443 = vmatprep.subr.mxu0 0.0
        %444 = vmatpush1.msra.mxu0 0.0
        %445 = vmatprep.subr.mxu0 0.0
        %446 = vmatpush1.msra.mxu0 0.0
        %447 = vmatprep.subr.mxu0 0.0
        %448 = vmatpush1.msra.mxu0 0.0
        %449 = vmatprep.subr.mxu0 0.0
        %450 = vmatpush1.msra.mxu0 0.0
        %451 = vmatprep.subr.mxu0 0.0
        %452 = vmatpush1.msra.mxu0 0.0
        %453 = vmatprep.subr.mxu0 0.0
        %454 = vmatpush1.msra.mxu0 0.0
        %455 = vmatprep.subr.mxu0 0.0
        %456 = vmatpush1.msra.mxu0 0.0
        %457 = vmatprep.subr.mxu0 0.0
        %458 = vmatpush1.msra.mxu0 0.0
        %459 = vmatprep.subr.mxu0 0.0
        %460 = vmatpush1.msra.mxu0 0.0
        %461 = vmatprep.subr.mxu0 0.0
        %462 = vmatpush1.msra.mxu0 0.0
        %463 = vmatprep.mubr.f32.mxu0 0.0
        %464 = vmatmul.mubr.f32.gmra.mrb[0].mxu0 %v394
        %v465 = vpop.f32.mrb[0].mxu0
        %v466 = vadd.f32 0.0, %v465
        %v467 = vpop.f32.mrb[0].mxu0
        %468 = vmatprep.mubr.f32.mxu0 0.0
        %469 = vmatmul.mubr.f32.gmra.mrb[0].mxu0 %v397
        %v470 = vpop.f32.mrb[0].mxu0
        %v471 = vadd.f32 0.0, %v470
        %v472 = vpop.f32.mrb[0].mxu0
        %473 = vdwg.mxu0
        %474 = vst [vmem:[%s191] sm:$0xff] %v466
        %475 = vst [vmem:[%s191 + $0x8] sm:$0xff] %v471
        %s476 = sand.u32 %s115, 1
        %s477 = scalar_lea.sflag [#allocation3], %s476
        %s478 = sand.u32 %s115, 1
        %s479 = smul.addr %s478, 16
        %s480 = scalar_lea.vmem [#allocation2], %s479
        // Predicated region
        $region37: #{tpu_custom_call.1} parent=35 // pred_check
          %p481 = pneg %p125
        $region38: #{tpu_custom_call.1} parent=35 // pred_check_branch
          %483 = sbr.rel (%p481) target = $region40
        $region39: #{tpu_custom_call.1} parent=35 // pred_region
          %s484 = smul.u32 2, %s18
          %s486 = ssub.s32 256, 256
          %487 = vsyncadd %s477, %s486
          %s488 = smul.addr %s484, 128
          %s489 = scalar_lea.hbm %s4, %s488
          %s490 = sshll.u32 %s480, 4
          %s491 = int_to_ptr.vmem [resolvable:$true] %s490
          %496 = dma.vmem_to_hbm [thread:$0]  %s491, 256, %s489, %s477, 128, 128, 8
        $region40: #{tpu_custom_call.1} parent=35 // pred_fallthru
          _
      $region36: #{tpu_custom_call.1} parent=5 // pred_fallthru
        _
      %p497 = scmp.le.s32.totalorder 2, %s13
      // Predicated region
      $region41: #{tpu_custom_call.1} parent=5 // pred_check
        %p498 = pneg %p497
      $region42: #{tpu_custom_call.1} parent=5 // pred_check_branch
        %500 = sbr.rel (%p498) target = $region44
      $region43: #{tpu_custom_call.1} parent=5 // pred_region
        %s501 = ssub.s32 %s13, 2
        // Predicated region
        $region45: #{tpu_custom_call.1} parent=43 // pred_check
          %p502 = pneg %p131
        $region46: #{tpu_custom_call.1} parent=43 // pred_check_branch
          %504 = sbr.rel (%p502) target = $region48
        $region47: #{tpu_custom_call.1} parent=43 // pred_region
          %s505 = sand.u32 %s116, 1
          %s506 = scalar_lea.sflag [#allocation3], %s505
          %s507 = sand.u32 %s116, 1
          %s508 = smul.addr %s507, 16
          %s509 = scalar_lea.vmem [#allocation2], %s508
          %510 = dma.done %s506, 256
        $region48: #{tpu_custom_call.1} parent=43 // pred_fallthru
          _
      $region44: #{tpu_custom_call.1} parent=5 // pred_fallthru
        _
    $region6: #{tpu_custom_call.1} parent=1 // loop_footer
      %s17 = sadd.s32 1, %s13
    $region7: #{tpu_custom_call.1} parent=1 // loop_footer_branch
      %12 = sbr.rel target = $region3
    $region8: #{tpu_custom_call.1} parent=1 // loop_exit
      _
    %511 = vsyncpa [#allocation3], 1
    %s512 = scalar_lea.sflag [#allocation3], 1
    %513 = vsyncpa %s512, 1

</llo_original>
